<compile_context>
chip_gen: v6e
topology: v6e:2x2x1
jax: 0.10.0
libtpu: 0.0.40
codegen_flags: <defaults>
</compile_context>

<pallas_src>
import functools
import math

import jax
import jax.numpy as jnp
from jax.experimental import pallas as pl
from jax.experimental.pallas import tpu as pltpu


def _round_up(x: int, m: int) -> int:
    return ((x + m - 1) // m) * m


def _vmem_capacity_bytes() -> int:
    """Physical per-core VMEM, with a conservative fallback (v7x = 64 MiB)."""
    try:
        return int(pltpu.get_tpu_info().vmem_capacity_bytes)
    except Exception:
        return 64 * 2**20


# ---------------------------------------------------------------------------
# Kernels
# ---------------------------------------------------------------------------
def _xw_kernel(x_ref, w_ref, xw_ref):
    """xw_tile = x_tile @ W   (W resident, single K step)."""
    xw_ref[...] = jnp.dot(
        x_ref[...], w_ref[...], preferred_element_type=jnp.float32
    ).astype(xw_ref.dtype)


def _adj_xw_resident_kernel(adj_ref, xw_ref, o_ref):
    """out_tile = adj_row_tile @ xw   (xw fully resident, single K step)."""
    o_ref[...] = jnp.dot(
        adj_ref[...], xw_ref[...], preferred_element_type=jnp.float32
    ).astype(o_ref.dtype)


def _adj_xw_ktiled_kernel(adj_ref, xw_ref, o_ref, acc_ref):
    """Large-N fallback: K-tiled adj @ xw with an f32 accumulator scratch."""

    @pl.when(pl.program_id(1) == 0)
    def _():
        acc_ref[...] = jnp.zeros_like(acc_ref)

    acc_ref[...] += jnp.dot(
        adj_ref[...], xw_ref[...], preferred_element_type=jnp.float32
    )

    @pl.when(pl.program_id(1) == pl.num_programs(1) - 1)
    def _():
        o_ref[...] = acc_ref[...].astype(o_ref.dtype)


# ---------------------------------------------------------------------------
# Host-side wrapper
# ---------------------------------------------------------------------------
def preprocess_adjacency(adj, dtype=jnp.float32):
    """Pad adj to a 128-multiple and cast once (amortised across GCN layers)."""
    n = adj.shape[0]
    n_p = _round_up(n, 128)
    return jnp.pad(adj, ((0, n_p - n), (0, n_p - n))).astype(dtype)


@functools.partial(
    jax.jit, static_argnames=("adj_dtype", "tm_target", "_force_ktiled")
)
def graph_convolution_forward(
    x, adj, W, *, adj_dtype=jnp.float32, tm_target=512, _force_ktiled=False
):
    """adj @ (x @ W) on TPU via two Pallas kernels.

    x:   [N, F_in]      float32
    adj: [N, N] float32, or a preprocess_adjacency() result of shape
         [round_up(N,128)]^2 in `adj_dtype` (skips the per-call pad/cast).
    W:   [F_in, F_out]  float32
    returns [N, F_out] float32
    """
    N, F_in = x.shape
    F_out = W.shape[1]
    assert W.shape[0] == F_in, "W must be [F_in, F_out]"

    adj_dt = jnp.dtype(adj_dtype)
    adj_sz = adj_dt.itemsize
    sub_mult = 8 * max(1, 4 // adj_sz)  # 8 (f32) / 16 (bf16) / 32 (int8)

    n_p = _round_up(N, 128)       # lane dim of adj tiles & K of adj @ xw
    f_in_p = _round_up(F_in, 128)
    f_out_p = _round_up(F_out, 128)

    assert adj.shape in ((N, N), (n_p, n_p)), "adj must be [N,N] or pre-padded"

    vmem_phys = _vmem_capacity_bytes()
    vmem_budget = int(vmem_phys * 0.70)   # headroom for compiler scratch
    vmem_ceiling = int(vmem_phys * 0.90)  # never exceed physical VMEM

    def _limit(est_bytes):
        return int(min(vmem_ceiling, max(est_bytes * 3 // 2, 32 * 2**20)))

    # ---- pad / cast inputs (adj pad/cast skipped when pre-processed) ------
    x_p = jnp.pad(x.astype(jnp.float32), ((0, n_p - N), (0, f_in_p - F_in)))
    w_p = jnp.pad(W.astype(jnp.float32), ((0, f_in_p - F_in), (0, f_out_p - F_out)))
    if adj.shape == (n_p, n_p) and adj.dtype == adj_dt:
        adj_p = adj
    else:
        adj_p = jnp.pad(adj, ((0, n_p - N), (0, n_p - N))).astype(adj_dt)

    # -----------------------------------------------------------------------
    # Stage 1: xw = x @ W   (row-tiled over x, W resident, single K step)
    # -----------------------------------------------------------------------
    tm1 = min(_round_up(tm_target, sub_mult), n_p)

    def _xw_bytes(t):
        return (2 * t * f_in_p * 4            # x row tile (double-buffered)
                + 2 * f_in_p * f_out_p * 4    # resident W (conservative 2x)
                + 2 * t * f_out_p * adj_sz)   # xw output tile

    while tm1 > sub_mult and _xw_bytes(tm1) > vmem_budget:
        tm1 = max(sub_mult, (tm1 // 2 // sub_mult) * sub_mult)
    # TODO(synk): also tile F_in / F_out when W alone exceeds the VMEM budget.

    xw = pl.pallas_call(
        _xw_kernel,
        out_shape=jax.ShapeDtypeStruct((n_p, f_out_p), adj_dt),
        grid_spec=pltpu.PrefetchScalarGridSpec(
            num_scalar_prefetch=0,
            grid=(pl.cdiv(n_p, tm1),),
            in_specs=[
                pl.BlockSpec((tm1, f_in_p), lambda i: (i, 0)),
                pl.BlockSpec((f_in_p, f_out_p), lambda i: (0, 0)),
            ],
            out_specs=pl.BlockSpec((tm1, f_out_p), lambda i: (i, 0)),
        ),
        compiler_params=pltpu.CompilerParams(
            dimension_semantics=("parallel",),
            vmem_limit_bytes=_limit(_xw_bytes(tm1)),
        ),
        cost_estimate=pl.CostEstimate(
            flops=2 * n_p * f_in_p * f_out_p,
            transcendentals=0,
            bytes_accessed=n_p * f_in_p * 4 + f_in_p * f_out_p * 4
            + n_p * f_out_p * adj_sz,
        ),
    )(x_p, w_p)

    # -----------------------------------------------------------------------
    # Stage 2: out = adj @ xw   (dominant, HBM-bound)
    # -----------------------------------------------------------------------
    cost2 = pl.CostEstimate(
        flops=2 * n_p * n_p * f_out_p,
        transcendentals=0,
        bytes_accessed=n_p * n_p * adj_sz + n_p * f_out_p * adj_sz
        + n_p * f_out_p * 4,
    )

    def _resident_bytes(t):
        return (2 * t * n_p * adj_sz           # adj row tile (double-buffered)
                + 2 * n_p * f_out_p * adj_sz   # resident xw (conservative 2x)
                + 2 * t * f_out_p * 4)         # output tile

    tm = min(_round_up(tm_target, sub_mult), n_p)
    while tm > sub_mult and _resident_bytes(tm) > vmem_budget:
        tm = max(sub_mult, (tm // 2 // sub_mult) * sub_mult)

    if not _force_ktiled and _resident_bytes(tm) <= vmem_budget:
        # Resident-xw path: single K step -> direct write, "parallel" grid so
        # both v7x TensorCores split the adj row tiles.
        out_p = pl.pallas_call(
            _adj_xw_resident_kernel,
            out_shape=jax.ShapeDtypeStruct((n_p, f_out_p), jnp.float32),
            grid_spec=pltpu.PrefetchScalarGridSpec(
                num_scalar_prefetch=0,
                grid=(pl.cdiv(n_p, tm),),
                in_specs=[
                    pl.BlockSpec((tm, n_p), lambda i: (i, 0)),
                    pl.BlockSpec((n_p, f_out_p), lambda i: (0, 0)),
                ],
                out_specs=pl.BlockSpec((tm, f_out_p), lambda i: (i, 0)),
            ),
            compiler_params=pltpu.CompilerParams(
                dimension_semantics=("parallel",),
                vmem_limit_bytes=_limit(_resident_bytes(tm)),
            ),
            cost_estimate=cost2,
        )(adj_p, xw)
    else:
        # Large-N fallback: tile adj columns / xw rows over a K grid axis.
        if _force_ktiled:
            tm2, tk = min(128, n_p), 128
        else:
            tk = next(t for t in (512, 256, 128) if n_p % t == 0)
            tm2 = min(_round_up(tm_target, sub_mult), n_p)

            def _ktiled_bytes(m, k):
                return (2 * m * k * adj_sz + 2 * k * f_out_p * adj_sz
                        + 2 * m * f_out_p * 4 + m * f_out_p * 4)

            while _ktiled_bytes(tm2, tk) > vmem_budget and (tm2 > 128 or tk > 128):
                if tk > 128:
                    tk //= 2
                else:
                    tm2 = max(128, (tm2 // 2 // sub_mult) * sub_mult)
            # TODO(synk): tile F_out as well if (128,128) tiles still don't fit.

        est2 = (2 * tm2 * tk * adj_sz + 2 * tk * f_out_p * adj_sz
                + 2 * tm2 * f_out_p * 4 + tm2 * f_out_p * 4)

        out_p = pl.pallas_call(
            _adj_xw_ktiled_kernel,
            out_shape=jax.ShapeDtypeStruct((n_p, f_out_p), jnp.float32),
            grid_spec=pltpu.PrefetchScalarGridSpec(
                num_scalar_prefetch=0,
                grid=(pl.cdiv(n_p, tm2), n_p // tk),
                in_specs=[
                    pl.BlockSpec((tm2, tk), lambda i, k: (i, k)),
                    pl.BlockSpec((tk, f_out_p), lambda i, k: (k, 0)),
                ],
                out_specs=pl.BlockSpec((tm2, f_out_p), lambda i, k: (i, 0)),
                scratch_shapes=[pltpu.VMEM((tm2, f_out_p), jnp.float32)],
            ),
            compiler_params=pltpu.CompilerParams(
                dimension_semantics=("parallel", "arbitrary"),
                vmem_limit_bytes=_limit(est2),
            ),
            cost_estimate=cost2,
        )(adj_p, xw)

    return out_p[:N, :F_out]


def xavier_uniform(key, in_features, out_features):
    # Matches torch.nn.init.xavier_uniform_ with gain=1.
    bound = math.sqrt(6.0 / (in_features + out_features))
    return jax.random.uniform(
        key, (in_features, out_features), dtype=jnp.float32,
        minval=-bound, maxval=bound,
    )


if __name__ == "__main__":
    # Small GCN-shaped inputs: N nodes, F_in -> F_out features.
    N, F_IN, F_OUT = 128, 32, 64

    key = jax.random.PRNGKey(0)
    k_x, k_adj, k_w = jax.random.split(key, 3)

    x = jax.random.normal(k_x, (N, F_IN), dtype=jnp.float32)
    adj = jax.random.uniform(k_adj, (N, N), dtype=jnp.float32)
    W = xavier_uniform(k_w, F_IN, F_OUT)

    ref = adj @ (x @ W)

    # f32 path (resident-xw, "parallel" grid): tight check vs plain JAX.
    out = jax.block_until_ready(graph_convolution_forward(x, adj, W))
    assert out.shape == (N, F_OUT)
    assert jnp.allclose(out, ref, atol=1e-3, rtol=1e-3), "f32 mismatch vs reference"

    # bf16-adjacency path (halves HBM traffic of the memory-bound adj stage).
    # The adjacency is pre-processed ONCE so the N^2 cast is amortised.
    adj_bf16 = preprocess_adjacency(adj, dtype=jnp.bfloat16)
    out_bf16 = jax.block_until_ready(
        graph_convolution_forward(x, adj_bf16, W, adj_dtype=jnp.bfloat16)
    )
    assert out_bf16.shape == (N, F_OUT)
    assert jnp.allclose(out_bf16, ref, atol=0.5, rtol=5e-2), "bf16 mismatch vs reference"

    # Exercise the large-N K-tiled fallback path on a small forced example.
    N2 = 256
    x2 = jax.random.normal(k_x, (N2, F_IN), dtype=jnp.float32)
    adj2 = jax.random.uniform(k_adj, (N2, N2), dtype=jnp.float32)
    ref2 = adj2 @ (x2 @ W)
    out2 = jax.block_until_ready(
        graph_convolution_forward(x2, adj2, W, _force_ktiled=True)
    )
    assert out2.shape == (N2, F_OUT)
    assert jnp.allclose(out2, ref2, atol=1e-2, rtol=1e-3), "K-tiled mismatch vs reference"

    print("KERNEL_OK")
</pallas_src>

<mosaic_0001>
module attributes {stable_mosaic.version = 11 : i64} {
  func.func @_xw_kernel(%arg0: i32, %arg1: memref<128x128xf32, #tpu.memory_space<vmem>>, %arg2: memref<128x128xf32, #tpu.memory_space<vmem>>, %arg3: memref<128x128xf32, #tpu.memory_space<vmem>>) attributes {dimension_semantics = [#tpu.dimension_semantics<parallel>], iteration_bounds = array<i64: 1>, scalar_prefetch = 0 : i64, scratch_operands = 0 : i64, tpu.core_type = #tpu.core_type<tc>, window_params = [{transform_indices = @transform_0, window_bounds = array<i64: 128, 128>}, {pipeline_mode = #tpu.pipeline_mode<synchronous>, transform_indices = @transform_1, window_bounds = array<i64: 128, 128>}, {transform_indices = @transform_2, window_bounds = array<i64: 128, 128>}]} {
    %c0 = arith.constant 0 : index
    %c0_0 = arith.constant 0 : index
    %0 = vector.load %arg1[%c0, %c0_0] : memref<128x128xf32, #tpu.memory_space<vmem>>, vector<128x128xf32>
    %c0_1 = arith.constant 0 : index
    %c0_2 = arith.constant 0 : index
    %1 = vector.load %arg2[%c0_1, %c0_2] : memref<128x128xf32, #tpu.memory_space<vmem>>, vector<128x128xf32>
    %cst = arith.constant dense<0.000000e+00> : vector<128x128xf32>
    %2 = tpu.matmul %0, %1, %cst {dimension_numbers = #tpu.dot_dimension_numbers<[1], [0], [0], [1], [0, 0, 1, 1], [], []>} : vector<128x128xf32>, vector<128x128xf32>, vector<128x128xf32> -> vector<128x128xf32>
    %c0_3 = arith.constant 0 : index
    %c0_4 = arith.constant 0 : index
    %3 = vector.load %arg3[%c0_3, %c0_4] : memref<128x128xf32, #tpu.memory_space<vmem>>, vector<128x128xf32>
    tpu.vector_store %arg3[%c0_3, %c0_4], %2 {strides = array<i32>} : memref<128x128xf32, #tpu.memory_space<vmem>>, vector<128x128xf32>,
    return
  }
  func.func @transform_0(%arg0: i32) -> (i32, i32) {
    %c0_i32 = arith.constant 0 : i32
    %c0_i32_0 = arith.constant 0 : i32
    return %arg0, %c0_i32 : i32, i32
  }
  func.func @transform_1(%arg0: i32) -> (i32, i32) {
    %c0_i32 = arith.constant 0 : i32
    %c0_i32_0 = arith.constant 0 : i32
    %c0_i32_1 = arith.constant 0 : i32
    return %c0_i32, %c0_i32_0 : i32, i32
  }
  func.func @transform_2(%arg0: i32) -> (i32, i32) {
    %c0_i32 = arith.constant 0 : i32
    %c0_i32_0 = arith.constant 0 : i32
    return %arg0, %c0_i32 : i32, i32
  }
}

module attributes {stable_mosaic.version = 11 : i64} {
  func.func @_adj_xw_resident_kernel(%arg0: i32, %arg1: memref<128x128xf32, #tpu.memory_space<vmem>>, %arg2: memref<128x128xf32, #tpu.memory_space<vmem>>, %arg3: memref<128x128xf32, #tpu.memory_space<vmem>>) attributes {dimension_semantics = [#tpu.dimension_semantics<parallel>], iteration_bounds = array<i64: 1>, scalar_prefetch = 0 : i64, scratch_operands = 0 : i64, tpu.core_type = #tpu.core_type<tc>, window_params = [{transform_indices = @transform_0, window_bounds = array<i64: 128, 128>}, {pipeline_mode = #tpu.pipeline_mode<synchronous>, transform_indices = @transform_1, window_bounds = array<i64: 128, 128>}, {transform_indices = @transform_2, window_bounds = array<i64: 128, 128>}]} {
    %c0 = arith.constant 0 : index
    %c0_0 = arith.constant 0 : index
    %0 = vector.load %arg1[%c0, %c0_0] : memref<128x128xf32, #tpu.memory_space<vmem>>, vector<128x128xf32>
    %c0_1 = arith.constant 0 : index
    %c0_2 = arith.constant 0 : index
    %1 = vector.load %arg2[%c0_1, %c0_2] : memref<128x128xf32, #tpu.memory_space<vmem>>, vector<128x128xf32>
    %cst = arith.constant dense<0.000000e+00> : vector<128x128xf32>
    %2 = tpu.matmul %0, %1, %cst {dimension_numbers = #tpu.dot_dimension_numbers<[1], [0], [0], [1], [0, 0, 1, 1], [], []>} : vector<128x128xf32>, vector<128x128xf32>, vector<128x128xf32> -> vector<128x128xf32>
    %c0_3 = arith.constant 0 : index
    %c0_4 = arith.constant 0 : index
    %3 = vector.load %arg3[%c0_3, %c0_4] : memref<128x128xf32, #tpu.memory_space<vmem>>, vector<128x128xf32>
    tpu.vector_store %arg3[%c0_3, %c0_4], %2 {strides = array<i32>} : memref<128x128xf32, #tpu.memory_space<vmem>>, vector<128x128xf32>,
    return
  }
  func.func @transform_0(%arg0: i32) -> (i32, i32) {
    %c0_i32 = arith.constant 0 : i32
    %c0_i32_0 = arith.constant 0 : i32
    return %arg0, %c0_i32 : i32, i32
  }
  func.func @transform_1(%arg0: i32) -> (i32, i32) {
    %c0_i32 = arith.constant 0 : i32
    %c0_i32_0 = arith.constant 0 : i32
    %c0_i32_1 = arith.constant 0 : i32
    return %c0_i32, %c0_i32_0 : i32, i32
  }
  func.func @transform_2(%arg0: i32) -> (i32, i32) {
    %c0_i32 = arith.constant 0 : i32
    %c0_i32_0 = arith.constant 0 : i32
    return %arg0, %c0_i32 : i32, i32
  }
}

</mosaic_0001>

<llo_original>
// kernel: graph_convolution_forward.3
$region0: #{graph_convolution_forward.3}
  #allocation0 [shape = 'u32[]', space=smem, size = 0x4, offset = 0x4, fixed_abs, tag = 'smem constant byte address 0x4 - core index']
  #allocation1 [shape = 'u32[144,128]{1,0:T(1,128)}', space=vmem, size = 0x12000, scoped, tag = 'internal scratch']
  %s0 = inlined_call_operand.vmem [shape: f32[128,128], index: 0, kind: input, shape index: {}]
  %s1 = inlined_call_operand.vmem [shape: f32[128,128], index: 1, kind: input, shape index: {}]
  %s2 = inlined_call_operand.vmem [shape: f32[128,128], index: 2, kind: output, shape index: {}]
  %s3 = sld [smem:[#allocation0]]
  $region18: #{graph_convolution_forward.3} parent=0
    _
  %s5 = ssub.s32 1, %s3
  %s6 = scalar_select 0, %s5, %s3
  // Predicated region
  $region2: #{graph_convolution_forward.3} parent=0 // pred_check
    _
  $region3: #{graph_convolution_forward.3} parent=0 // pred_check_branch
    %8 = sbr.rel (0) target = $region5
  $region4: #{graph_convolution_forward.3} parent=0 // pred_region
    _
  $region5: #{graph_convolution_forward.3} parent=0 // pred_fallthru
    _
  // Predicated region
  $region6: #{graph_convolution_forward.3} parent=0 // pred_check
    _
  $region7: #{graph_convolution_forward.3} parent=0 // pred_check_branch
    %10 = sbr.rel (0) target = $region9
  $region8: #{graph_convolution_forward.3} parent=0 // pred_region
    _
  $region9: #{graph_convolution_forward.3} parent=0 // pred_fallthru
    _
  %v11 = vld [vmem:[%s0] sm:$0xff]
  %v12 = vld [vmem:[%s0 + $0x8] sm:$0xff]
  %v13 = vld [vmem:[%s0 + $0x10] sm:$0xff]
  %v14 = vld [vmem:[%s0 + $0x18] sm:$0xff]
  %v15 = vld [vmem:[%s0 + $0x20] sm:$0xff]
  %v16 = vld [vmem:[%s0 + $0x28] sm:$0xff]
  %v17 = vld [vmem:[%s0 + $0x30] sm:$0xff]
  %v18 = vld [vmem:[%s0 + $0x38] sm:$0xff]
  %v19 = vld [vmem:[%s0 + $0x40] sm:$0xff]
  %v20 = vld [vmem:[%s0 + $0x48] sm:$0xff]
  %v21 = vld [vmem:[%s0 + $0x50] sm:$0xff]
  %v22 = vld [vmem:[%s0 + $0x58] sm:$0xff]
  %v23 = vld [vmem:[%s0 + $0x60] sm:$0xff]
  %v24 = vld [vmem:[%s0 + $0x68] sm:$0xff]
  %v25 = vld [vmem:[%s0 + $0x70] sm:$0xff]
  %v26 = vld [vmem:[%s0 + $0x78] sm:$0xff]
  %v27 = vld [vmem:[%s1] sm:$0xff]
  %v28 = vld [vmem:[%s1 + $0x8] sm:$0xff]
  %v29 = vld [vmem:[%s1 + $0x10] sm:$0xff]
  %v30 = vld [vmem:[%s1 + $0x18] sm:$0xff]
  %v31 = vld [vmem:[%s1 + $0x20] sm:$0xff]
  %v32 = vld [vmem:[%s1 + $0x28] sm:$0xff]
  %v33 = vld [vmem:[%s1 + $0x30] sm:$0xff]
  %v34 = vld [vmem:[%s1 + $0x38] sm:$0xff]
  %v35 = vld [vmem:[%s1 + $0x40] sm:$0xff]
  %v36 = vld [vmem:[%s1 + $0x48] sm:$0xff]
  %v37 = vld [vmem:[%s1 + $0x50] sm:$0xff]
  %v38 = vld [vmem:[%s1 + $0x58] sm:$0xff]
  %v39 = vld [vmem:[%s1 + $0x60] sm:$0xff]
  %v40 = vld [vmem:[%s1 + $0x68] sm:$0xff]
  %v41 = vld [vmem:[%s1 + $0x70] sm:$0xff]
  %v42 = vld [vmem:[%s1 + $0x78] sm:$0xff]
  %43 = vmatprep.subr.mxu0 0.0
  %44 = vmatpush1.msra.mxu0 %v42
  %45 = vmatprep.subr.mxu0 0.0
  %46 = vmatpush1.msra.mxu0 %v41
  %47 = vmatprep.subr.mxu0 0.0
  %48 = vmatpush1.msra.mxu0 %v40
  %49 = vmatprep.subr.mxu0 0.0
  %50 = vmatpush1.msra.mxu0 %v39
  %51 = vmatprep.subr.mxu0 0.0
  %52 = vmatpush1.msra.mxu0 %v38
  %53 = vmatprep.subr.mxu0 0.0
  %54 = vmatpush1.msra.mxu0 %v37
  %55 = vmatprep.subr.mxu0 0.0
  %56 = vmatpush1.msra.mxu0 %v36
  %57 = vmatprep.subr.mxu0 0.0
  %58 = vmatpush1.msra.mxu0 %v35
  %59 = vmatprep.subr.mxu0 0.0
  %60 = vmatpush1.msra.mxu0 %v34
  %61 = vmatprep.subr.mxu0 0.0
  %62 = vmatpush1.msra.mxu0 %v33
  %63 = vmatprep.subr.mxu0 0.0
  %64 = vmatpush1.msra.mxu0 %v32
  %65 = vmatprep.subr.mxu0 0.0
  %66 = vmatpush1.msra.mxu0 %v31
  %67 = vmatprep.subr.mxu0 0.0
  %68 = vmatpush1.msra.mxu0 %v30
  %69 = vmatprep.subr.mxu0 0.0
  %70 = vmatpush1.msra.mxu0 %v29
  %71 = vmatprep.subr.mxu0 0.0
  %72 = vmatpush1.msra.mxu0 %v28
  %73 = vmatprep.subr.mxu0 0.0
  %74 = vmatpush1.msra.mxu0 %v27
  %75 = vmatprep.subr.mxu0 0.0
  %76 = vmatpush2.msra.mxu0 0.0
  %77 = vmatprep.subr.mxu0 0.0
  %78 = vmatpush2.msra.mxu0 0.0
  %79 = vmatprep.subr.mxu0 0.0
  %80 = vmatpush2.msra.mxu0 0.0
  %81 = vmatprep.subr.mxu0 0.0
  %82 = vmatpush2.msra.mxu0 0.0
  %83 = vmatprep.subr.mxu0 0.0
  %84 = vmatpush2.msra.mxu0 0.0
  %85 = vmatprep.subr.mxu0 0.0
  %86 = vmatpush2.msra.mxu0 0.0
  %87 = vmatprep.subr.mxu0 0.0
  %88 = vmatpush2.msra.mxu0 0.0
  %89 = vmatprep.subr.mxu0 0.0
  %90 = vmatpush2.msra.mxu0 0.0
  %91 = vmatprep.subr.mxu0 0.0
  %92 = vmatpush2.msra.mxu0 0.0
  %93 = vmatprep.subr.mxu0 0.0
  %94 = vmatpush2.msra.mxu0 0.0
  %95 = vmatprep.subr.mxu0 0.0
  %96 = vmatpush2.msra.mxu0 0.0
  %97 = vmatprep.subr.mxu0 0.0
  %98 = vmatpush2.msra.mxu0 0.0
  %99 = vmatprep.subr.mxu0 0.0
  %100 = vmatpush2.msra.mxu0 0.0
  %101 = vmatprep.subr.mxu0 0.0
  %102 = vmatpush2.msra.mxu0 0.0
  %103 = vmatprep.subr.mxu0 0.0
  %104 = vmatpush2.msra.mxu0 0.0
  %105 = vmatprep.subr.mxu0 0.0
  %106 = vmatpush2.msra.mxu0 0.0
  %107 = vmatprep.mubr.f32.mxu0 0.0
  %108 = vmatmul.mubr.f32.gmra.mxu0 %v11
  %v109 = vpop.f32.mrf.mxu0
  %v110 = vadd.f32 0.0, %v109
  %v111 = vpop.f32.mrf.mxu0
  %112 = vmatprep.mubr.f32.mxu0 0.0
  %113 = vmatmul.mubr.f32.gmra.mxu0 %v12
  %v114 = vpop.f32.mrf.mxu0
  %v115 = vadd.f32 0.0, %v114
  %v116 = vpop.f32.mrf.mxu0
  %117 = vmatprep.mubr.f32.mxu0 0.0
  %118 = vmatmul.mubr.f32.gmra.mxu0 %v13
  %v119 = vpop.f32.mrf.mxu0
  %v120 = vadd.f32 0.0, %v119
  %v121 = vpop.f32.mrf.mxu0
  %122 = vmatprep.mubr.f32.mxu0 0.0
  %123 = vmatmul.mubr.f32.gmra.mxu0 %v14
  %v124 = vpop.f32.mrf.mxu0
  %v125 = vadd.f32 0.0, %v124
  %v126 = vpop.f32.mrf.mxu0
  %127 = vmatprep.mubr.f32.mxu0 0.0
  %128 = vmatmul.mubr.f32.gmra.mxu0 %v15
  %v129 = vpop.f32.mrf.mxu0
  %v130 = vadd.f32 0.0, %v129
  %v131 = vpop.f32.mrf.mxu0
  %132 = vmatprep.mubr.f32.mxu0 0.0
  %133 = vmatmul.mubr.f32.gmra.mxu0 %v16
  %v134 = vpop.f32.mrf.mxu0
  %v135 = vadd.f32 0.0, %v134
  %v136 = vpop.f32.mrf.mxu0
  %137 = vmatprep.mubr.f32.mxu0 0.0
  %138 = vmatmul.mubr.f32.gmra.mxu0 %v17
  %v139 = vpop.f32.mrf.mxu0
  %v140 = vadd.f32 0.0, %v139
  %v141 = vpop.f32.mrf.mxu0
  %142 = vmatprep.mubr.f32.mxu0 0.0
  %143 = vmatmul.mubr.f32.gmra.mxu0 %v18
  %v144 = vpop.f32.mrf.mxu0
  %v145 = vadd.f32 0.0, %v144
  %v146 = vpop.f32.mrf.mxu0
  %147 = vmatprep.mubr.f32.mxu0 0.0
  %148 = vmatmul.mubr.f32.gmra.mxu0 %v19
  %v149 = vpop.f32.mrf.mxu0
  %v150 = vadd.f32 0.0, %v149
  %v151 = vpop.f32.mrf.mxu0
  %152 = vmatprep.mubr.f32.mxu0 0.0
  %153 = vmatmul.mubr.f32.gmra.mxu0 %v20
  %v154 = vpop.f32.mrf.mxu0
  %v155 = vadd.f32 0.0, %v154
  %v156 = vpop.f32.mrf.mxu0
  %157 = vmatprep.mubr.f32.mxu0 0.0
  %158 = vmatmul.mubr.f32.gmra.mxu0 %v21
  %v159 = vpop.f32.mrf.mxu0
  %v160 = vadd.f32 0.0, %v159
  %v161 = vpop.f32.mrf.mxu0
  %162 = vmatprep.mubr.f32.mxu0 0.0
  %163 = vmatmul.mubr.f32.gmra.mxu0 %v22
  %v164 = vpop.f32.mrf.mxu0
  %v165 = vadd.f32 0.0, %v164
  %v166 = vpop.f32.mrf.mxu0
  %167 = vmatprep.mubr.f32.mxu0 0.0
  %168 = vmatmul.mubr.f32.gmra.mxu0 %v23
  %v169 = vpop.f32.mrf.mxu0
  %v170 = vadd.f32 0.0, %v169
  %v171 = vpop.f32.mrf.mxu0
  %172 = vmatprep.mubr.f32.mxu0 0.0
  %173 = vmatmul.mubr.f32.gmra.mxu0 %v24
  %v174 = vpop.f32.mrf.mxu0
  %v175 = vadd.f32 0.0, %v174
  %v176 = vpop.f32.mrf.mxu0
  %177 = vmatprep.mubr.f32.mxu0 0.0
  %178 = vmatmul.mubr.f32.gmra.mxu0 %v25
  %v179 = vpop.f32.mrf.mxu0
  %v180 = vadd.f32 0.0, %v179
  %v181 = vpop.f32.mrf.mxu0
  %182 = vmatprep.mubr.f32.mxu0 0.0
  %183 = vmatmul.mubr.f32.gmra.mxu0 %v26
  %v184 = vpop.f32.mrf.mxu0
  %v185 = vadd.f32 0.0, %v184
  %v186 = vpop.f32.mrf.mxu0
  %187 = vdwg.mxu0
  %188 = vst [vmem:[%s2] sm:$0xff] %v110
  %189 = vst [vmem:[%s2 + $0x8] sm:$0xff] %v115
  %190 = vst [vmem:[%s2 + $0x10] sm:$0xff] %v120
  %191 = vst [vmem:[%s2 + $0x18] sm:$0xff] %v125
  %192 = vst [vmem:[%s2 + $0x20] sm:$0xff] %v130
  %193 = vst [vmem:[%s2 + $0x28] sm:$0xff] %v135
  %194 = vst [vmem:[%s2 + $0x30] sm:$0xff] %v140
  %195 = vst [vmem:[%s2 + $0x38] sm:$0xff] %v145
  %196 = vst [vmem:[%s2 + $0x40] sm:$0xff] %v150
  %197 = vst [vmem:[%s2 + $0x48] sm:$0xff] %v155
  %198 = vst [vmem:[%s2 + $0x50] sm:$0xff] %v160
  %199 = vst [vmem:[%s2 + $0x58] sm:$0xff] %v165
  %200 = vst [vmem:[%s2 + $0x60] sm:$0xff] %v170
  %201 = vst [vmem:[%s2 + $0x68] sm:$0xff] %v175
  %202 = vst [vmem:[%s2 + $0x70] sm:$0xff] %v180
  %203 = vst [vmem:[%s2 + $0x78] sm:$0xff] %v185
  // Predicated region
  $region10: #{graph_convolution_forward.3} parent=0 // pred_check
    _
  $region11: #{graph_convolution_forward.3} parent=0 // pred_check_branch
    %205 = sbr.rel (0) target = $region13
  $region12: #{graph_convolution_forward.3} parent=0 // pred_region
    _
  $region13: #{graph_convolution_forward.3} parent=0 // pred_fallthru
    _
  // Predicated region
  $region14: #{graph_convolution_forward.3} parent=0 // pred_check
    _
  $region15: #{graph_convolution_forward.3} parent=0 // pred_check_branch
    %207 = sbr.rel (0) target = $region17
  $region16: #{graph_convolution_forward.3} parent=0 // pred_region
    _
  $region17: #{graph_convolution_forward.3} parent=0 // pred_fallthru
    _

// kernel: graph_convolution_forward.2
$region0: #{graph_convolution_forward.2}
  #allocation0 [shape = 'u32[]', space=smem, size = 0x4, offset = 0x4, fixed_abs, tag = 'smem constant byte address 0x4 - core index']
  #allocation1 [shape = 'u32[144,128]{1,0:T(1,128)}', space=vmem, size = 0x12000, scoped, tag = 'internal scratch']
  %s0 = inlined_call_operand.vmem [shape: f32[128,128], index: 0, kind: input, shape index: {}]
  %s1 = inlined_call_operand.vmem [shape: f32[128,128], index: 1, kind: input, shape index: {}]
  %s2 = inlined_call_operand.vmem [shape: f32[128,128], index: 2, kind: output, shape index: {}]
  %s3 = sld [smem:[#allocation0]]
  $region18: #{graph_convolution_forward.2} parent=0
    _
  %s5 = ssub.s32 1, %s3
  %s6 = scalar_select 0, %s5, %s3
  // Predicated region
  $region2: #{graph_convolution_forward.2} parent=0 // pred_check
    _
  $region3: #{graph_convolution_forward.2} parent=0 // pred_check_branch
    %8 = sbr.rel (0) target = $region5
  $region4: #{graph_convolution_forward.2} parent=0 // pred_region
    _
  $region5: #{graph_convolution_forward.2} parent=0 // pred_fallthru
    _
  // Predicated region
  $region6: #{graph_convolution_forward.2} parent=0 // pred_check
    _
  $region7: #{graph_convolution_forward.2} parent=0 // pred_check_branch
    %10 = sbr.rel (0) target = $region9
  $region8: #{graph_convolution_forward.2} parent=0 // pred_region
    _
  $region9: #{graph_convolution_forward.2} parent=0 // pred_fallthru
    _
  %v11 = vld [vmem:[%s0] sm:$0xff]
  %v12 = vld [vmem:[%s0 + $0x8] sm:$0xff]
  %v13 = vld [vmem:[%s0 + $0x10] sm:$0xff]
  %v14 = vld [vmem:[%s0 + $0x18] sm:$0xff]
  %v15 = vld [vmem:[%s0 + $0x20] sm:$0xff]
  %v16 = vld [vmem:[%s0 + $0x28] sm:$0xff]
  %v17 = vld [vmem:[%s0 + $0x30] sm:$0xff]
  %v18 = vld [vmem:[%s0 + $0x38] sm:$0xff]
  %v19 = vld [vmem:[%s0 + $0x40] sm:$0xff]
  %v20 = vld [vmem:[%s0 + $0x48] sm:$0xff]
  %v21 = vld [vmem:[%s0 + $0x50] sm:$0xff]
  %v22 = vld [vmem:[%s0 + $0x58] sm:$0xff]
  %v23 = vld [vmem:[%s0 + $0x60] sm:$0xff]
  %v24 = vld [vmem:[%s0 + $0x68] sm:$0xff]
  %v25 = vld [vmem:[%s0 + $0x70] sm:$0xff]
  %v26 = vld [vmem:[%s0 + $0x78] sm:$0xff]
  %v27 = vld [vmem:[%s1] sm:$0xff]
  %v28 = vld [vmem:[%s1 + $0x8] sm:$0xff]
  %v29 = vld [vmem:[%s1 + $0x10] sm:$0xff]
  %v30 = vld [vmem:[%s1 + $0x18] sm:$0xff]
  %v31 = vld [vmem:[%s1 + $0x20] sm:$0xff]
  %v32 = vld [vmem:[%s1 + $0x28] sm:$0xff]
  %v33 = vld [vmem:[%s1 + $0x30] sm:$0xff]
  %v34 = vld [vmem:[%s1 + $0x38] sm:$0xff]
  %v35 = vld [vmem:[%s1 + $0x40] sm:$0xff]
  %v36 = vld [vmem:[%s1 + $0x48] sm:$0xff]
  %v37 = vld [vmem:[%s1 + $0x50] sm:$0xff]
  %v38 = vld [vmem:[%s1 + $0x58] sm:$0xff]
  %v39 = vld [vmem:[%s1 + $0x60] sm:$0xff]
  %v40 = vld [vmem:[%s1 + $0x68] sm:$0xff]
  %v41 = vld [vmem:[%s1 + $0x70] sm:$0xff]
  %v42 = vld [vmem:[%s1 + $0x78] sm:$0xff]
  %43 = vmatprep.subr.mxu0 0.0
  %44 = vmatpush1.msra.mxu0 %v42
  %45 = vmatprep.subr.mxu0 0.0
  %46 = vmatpush1.msra.mxu0 %v41
  %47 = vmatprep.subr.mxu0 0.0
  %48 = vmatpush1.msra.mxu0 %v40
  %49 = vmatprep.subr.mxu0 0.0
  %50 = vmatpush1.msra.mxu0 %v39
  %51 = vmatprep.subr.mxu0 0.0
  %52 = vmatpush1.msra.mxu0 %v38
  %53 = vmatprep.subr.mxu0 0.0
  %54 = vmatpush1.msra.mxu0 %v37
  %55 = vmatprep.subr.mxu0 0.0
  %56 = vmatpush1.msra.mxu0 %v36
  %57 = vmatprep.subr.mxu0 0.0
  %58 = vmatpush1.msra.mxu0 %v35
  %59 = vmatprep.subr.mxu0 0.0
  %60 = vmatpush1.msra.mxu0 %v34
  %61 = vmatprep.subr.mxu0 0.0
  %62 = vmatpush1.msra.mxu0 %v33
  %63 = vmatprep.subr.mxu0 0.0
  %64 = vmatpush1.msra.mxu0 %v32
  %65 = vmatprep.subr.mxu0 0.0
  %66 = vmatpush1.msra.mxu0 %v31
  %67 = vmatprep.subr.mxu0 0.0
  %68 = vmatpush1.msra.mxu0 %v30
  %69 = vmatprep.subr.mxu0 0.0
  %70 = vmatpush1.msra.mxu0 %v29
  %71 = vmatprep.subr.mxu0 0.0
  %72 = vmatpush1.msra.mxu0 %v28
  %73 = vmatprep.subr.mxu0 0.0
  %74 = vmatpush1.msra.mxu0 %v27
  %75 = vmatprep.subr.mxu0 0.0
  %76 = vmatpush2.msra.mxu0 0.0
  %77 = vmatprep.subr.mxu0 0.0
  %78 = vmatpush2.msra.mxu0 0.0
  %79 = vmatprep.subr.mxu0 0.0
  %80 = vmatpush2.msra.mxu0 0.0
  %81 = vmatprep.subr.mxu0 0.0
  %82 = vmatpush2.msra.mxu0 0.0
  %83 = vmatprep.subr.mxu0 0.0
  %84 = vmatpush2.msra.mxu0 0.0
  %85 = vmatprep.subr.mxu0 0.0
  %86 = vmatpush2.msra.mxu0 0.0
  %87 = vmatprep.subr.mxu0 0.0
  %88 = vmatpush2.msra.mxu0 0.0
  %89 = vmatprep.subr.mxu0 0.0
  %90 = vmatpush2.msra.mxu0 0.0
  %91 = vmatprep.subr.mxu0 0.0
  %92 = vmatpush2.msra.mxu0 0.0
  %93 = vmatprep.subr.mxu0 0.0
  %94 = vmatpush2.msra.mxu0 0.0
  %95 = vmatprep.subr.mxu0 0.0
  %96 = vmatpush2.msra.mxu0 0.0
  %97 = vmatprep.subr.mxu0 0.0
  %98 = vmatpush2.msra.mxu0 0.0
  %99 = vmatprep.subr.mxu0 0.0
  %100 = vmatpush2.msra.mxu0 0.0
  %101 = vmatprep.subr.mxu0 0.0
  %102 = vmatpush2.msra.mxu0 0.0
  %103 = vmatprep.subr.mxu0 0.0
  %104 = vmatpush2.msra.mxu0 0.0
  %105 = vmatprep.subr.mxu0 0.0
  %106 = vmatpush2.msra.mxu0 0.0
  %107 = vmatprep.mubr.f32.mxu0 0.0
  %108 = vmatmul.mubr.f32.gmra.mxu0 %v11
  %v109 = vpop.f32.mrf.mxu0
  %v110 = vadd.f32 0.0, %v109
  %v111 = vpop.f32.mrf.mxu0
  %112 = vmatprep.mubr.f32.mxu0 0.0
  %113 = vmatmul.mubr.f32.gmra.mxu0 %v12
  %v114 = vpop.f32.mrf.mxu0
  %v115 = vadd.f32 0.0, %v114
  %v116 = vpop.f32.mrf.mxu0
  %117 = vmatprep.mubr.f32.mxu0 0.0
  %118 = vmatmul.mubr.f32.gmra.mxu0 %v13
  %v119 = vpop.f32.mrf.mxu0
  %v120 = vadd.f32 0.0, %v119
  %v121 = vpop.f32.mrf.mxu0
  %122 = vmatprep.mubr.f32.mxu0 0.0
  %123 = vmatmul.mubr.f32.gmra.mxu0 %v14
  %v124 = vpop.f32.mrf.mxu0
  %v125 = vadd.f32 0.0, %v124
  %v126 = vpop.f32.mrf.mxu0
  %127 = vmatprep.mubr.f32.mxu0 0.0
  %128 = vmatmul.mubr.f32.gmra.mxu0 %v15
  %v129 = vpop.f32.mrf.mxu0
  %v130 = vadd.f32 0.0, %v129
  %v131 = vpop.f32.mrf.mxu0
  %132 = vmatprep.mubr.f32.mxu0 0.0
  %133 = vmatmul.mubr.f32.gmra.mxu0 %v16
  %v134 = vpop.f32.mrf.mxu0
  %v135 = vadd.f32 0.0, %v134
  %v136 = vpop.f32.mrf.mxu0
  %137 = vmatprep.mubr.f32.mxu0 0.0
  %138 = vmatmul.mubr.f32.gmra.mxu0 %v17
  %v139 = vpop.f32.mrf.mxu0
  %v140 = vadd.f32 0.0, %v139
  %v141 = vpop.f32.mrf.mxu0
  %142 = vmatprep.mubr.f32.mxu0 0.0
  %143 = vmatmul.mubr.f32.gmra.mxu0 %v18
  %v144 = vpop.f32.mrf.mxu0
  %v145 = vadd.f32 0.0, %v144
  %v146 = vpop.f32.mrf.mxu0
  %147 = vmatprep.mubr.f32.mxu0 0.0
  %148 = vmatmul.mubr.f32.gmra.mxu0 %v19
  %v149 = vpop.f32.mrf.mxu0
  %v150 = vadd.f32 0.0, %v149
  %v151 = vpop.f32.mrf.mxu0
  %152 = vmatprep.mubr.f32.mxu0 0.0
  %153 = vmatmul.mubr.f32.gmra.mxu0 %v20
  %v154 = vpop.f32.mrf.mxu0
  %v155 = vadd.f32 0.0, %v154
  %v156 = vpop.f32.mrf.mxu0
  %157 = vmatprep.mubr.f32.mxu0 0.0
  %158 = vmatmul.mubr.f32.gmra.mxu0 %v21
  %v159 = vpop.f32.mrf.mxu0
  %v160 = vadd.f32 0.0, %v159
  %v161 = vpop.f32.mrf.mxu0
  %162 = vmatprep.mubr.f32.mxu0 0.0
  %163 = vmatmul.mubr.f32.gmra.mxu0 %v22
  %v164 = vpop.f32.mrf.mxu0
  %v165 = vadd.f32 0.0, %v164
  %v166 = vpop.f32.mrf.mxu0
  %167 = vmatprep.mubr.f32.mxu0 0.0
  %168 = vmatmul.mubr.f32.gmra.mxu0 %v23
  %v169 = vpop.f32.mrf.mxu0
  %v170 = vadd.f32 0.0, %v169
  %v171 = vpop.f32.mrf.mxu0
  %172 = vmatprep.mubr.f32.mxu0 0.0
  %173 = vmatmul.mubr.f32.gmra.mxu0 %v24
  %v174 = vpop.f32.mrf.mxu0
  %v175 = vadd.f32 0.0, %v174
  %v176 = vpop.f32.mrf.mxu0
  %177 = vmatprep.mubr.f32.mxu0 0.0
  %178 = vmatmul.mubr.f32.gmra.mxu0 %v25
  %v179 = vpop.f32.mrf.mxu0
  %v180 = vadd.f32 0.0, %v179
  %v181 = vpop.f32.mrf.mxu0
  %182 = vmatprep.mubr.f32.mxu0 0.0
  %183 = vmatmul.mubr.f32.gmra.mxu0 %v26
  %v184 = vpop.f32.mrf.mxu0
  %v185 = vadd.f32 0.0, %v184
  %v186 = vpop.f32.mrf.mxu0
  %187 = vdwg.mxu0
  %188 = vst [vmem:[%s2] sm:$0xff] %v110
  %189 = vst [vmem:[%s2 + $0x8] sm:$0xff] %v115
  %190 = vst [vmem:[%s2 + $0x10] sm:$0xff] %v120
  %191 = vst [vmem:[%s2 + $0x18] sm:$0xff] %v125
  %192 = vst [vmem:[%s2 + $0x20] sm:$0xff] %v130
  %193 = vst [vmem:[%s2 + $0x28] sm:$0xff] %v135
  %194 = vst [vmem:[%s2 + $0x30] sm:$0xff] %v140
  %195 = vst [vmem:[%s2 + $0x38] sm:$0xff] %v145
  %196 = vst [vmem:[%s2 + $0x40] sm:$0xff] %v150
  %197 = vst [vmem:[%s2 + $0x48] sm:$0xff] %v155
  %198 = vst [vmem:[%s2 + $0x50] sm:$0xff] %v160
  %199 = vst [vmem:[%s2 + $0x58] sm:$0xff] %v165
  %200 = vst [vmem:[%s2 + $0x60] sm:$0xff] %v170
  %201 = vst [vmem:[%s2 + $0x68] sm:$0xff] %v175
  %202 = vst [vmem:[%s2 + $0x70] sm:$0xff] %v180
  %203 = vst [vmem:[%s2 + $0x78] sm:$0xff] %v185
  // Predicated region
  $region10: #{graph_convolution_forward.2} parent=0 // pred_check
    _
  $region11: #{graph_convolution_forward.2} parent=0 // pred_check_branch
    %205 = sbr.rel (0) target = $region13
  $region12: #{graph_convolution_forward.2} parent=0 // pred_region
    _
  $region13: #{graph_convolution_forward.2} parent=0 // pred_fallthru
    _
  // Predicated region
  $region14: #{graph_convolution_forward.2} parent=0 // pred_check
    _
  $region15: #{graph_convolution_forward.2} parent=0 // pred_check_branch
    %207 = sbr.rel (0) target = $region17
  $region16: #{graph_convolution_forward.2} parent=0 // pred_region
    _
  $region17: #{graph_convolution_forward.2} parent=0 // pred_fallthru
    _

</llo_original>
